<compile_context>
chip_gen: v7x
topology: tpu7x:2x2x1
jax: 0.10.0
libtpu: 0.0.40
codegen_flags: <defaults>
</compile_context>

<pallas_src>
import functools

import jax
import jax.numpy as jnp
from jax.experimental import pallas as pl
from jax.experimental.pallas import tpu as pltpu


def conv_relu_kernel(x_ref, w_ref, o_ref, *, N, H, Hp, KH, WCin):
    """Fused conv+ReLU over the whole (stacked) batch in one step.

    x_ref: (N*Hp, W*Cin)      vertically halo-padded, NHWC-folded row stack
    w_ref: (KH*W*Cin, W*Cout) Toeplitz-expanded filter (encodes W 'same' pad)
    o_ref: (N, H, W*Cout)     lane-dense output tile
    """
    G = N * Hp - (KH - 1)          # merged matmul rows (incl. 2*pad junk rows
                                   # between images, dropped at store time)
    x = x_ref[...]
    # Split-K: KH sublane-shifted LHS views x (W*Cin)-row weight slabs,
    # accumulated in f32 on the MXU.  No lane concat / XLU relayout.
    acc = jnp.dot(x[0:G, :], w_ref[0:WCin, :],
                  preferred_element_type=jnp.float32)
    for kh in range(1, KH):
        acc = acc + jnp.dot(x[kh:kh + G, :],
                            w_ref[kh * WCin:(kh + 1) * WCin, :],
                            preferred_element_type=jnp.float32)
    y = jnp.maximum(acc, 0.0).astype(o_ref.dtype)
    # Drop the inter-image halo rows; static per-image stores.
    for n in range(N):
        o_ref[n] = y[n * Hp:n * Hp + H]


def toeplitz_weight(w_oihw, W):
    """Expand an OIHW conv filter into a (KH*W*Cin, W*Cout) matmul weight.

    Columns already encode the horizontal 'same' padding.  Built ONCE per
    weight set (module init), not per forward call.
        wmat[kh*W*Cin + w'*Cin + c, w*Cout + o] = w[o, c, kh, w'-w+pad]
    (zero where w'-w+pad is outside [0, KW)).
    """
    Cout, Cin, KH, KW = w_oihw.shape
    assert KH == KW and KH % 2 == 1, "CNN_ReLU semantics need an odd filter"
    pad = (KH - 1) // 2
    wt = jnp.transpose(w_oihw, (2, 3, 1, 0))                       # (KH,KW,Cin,Cout)
    kw = jnp.arange(W)[:, None] - jnp.arange(W)[None, :] + pad     # (w', w) -> kw
    valid = (kw >= 0) & (kw < KW)
    m = wt[:, jnp.clip(kw, 0, KW - 1), :, :]                       # (KH,W,W,Cin,Cout)
    m = m * valid[None, :, :, None, None].astype(wt.dtype)
    m = jnp.transpose(m, (0, 1, 3, 2, 4))                          # (KH,w',Cin,w,Cout)
    return m.reshape(KH * W * Cin, W * Cout)


@jax.jit
def cnn_relu_fwd(x_nchw, wmat):
    """Forward pass of CNN_ReLU given a precomputed Toeplitz weight."""
    N, Cin, H, W = x_nchw.shape
    KH = wmat.shape[0] // (W * Cin)
    Cout = wmat.shape[1] // W
    pad = (KH - 1) // 2
    Hp = H + 2 * pad

    # NCHW -> NHWC fold ((W,Cin) on lanes) -> vertical halo pad -> row stack.
    # Under jit, XLA fuses this chain into a single layout pass.
    xs = jnp.transpose(x_nchw, (0, 2, 3, 1)).reshape(N, H, W * Cin)
    xs = jnp.pad(xs, ((0, 0), (pad, pad), (0, 0))).reshape(N * Hp, W * Cin)

    kernel = functools.partial(conv_relu_kernel,
                               N=N, H=H, Hp=Hp, KH=KH, WCin=W * Cin)
    out = pl.pallas_call(
        kernel,
        out_shape=jax.ShapeDtypeStruct((N, H, W * Cout), x_nchw.dtype),
        grid=(1,),
        in_specs=[
            pl.BlockSpec((N * Hp, W * Cin), lambda i: (0, 0)),
            pl.BlockSpec((KH * W * Cin, W * Cout), lambda i: (0, 0)),
        ],
        out_specs=pl.BlockSpec((N, H, W * Cout), lambda i: (0, 0, 0)),
        compiler_params=pltpu.CompilerParams(
            dimension_semantics=("arbitrary",)),
    )(xs, wmat)

    out = out.reshape(N, H, W, Cout)
    return jnp.transpose(out, (0, 3, 1, 2))      # back to the module's NCHW


if __name__ == "__main__":
    # Module config: CNN_ReLU(in_channels=4, out_channels=8, filter_size=3)
    in_channels, out_channels, filter_size = 4, 8, 3
    N, H, W = 2, 16, 16

    key = jax.random.PRNGKey(0)
    kx, kw = jax.random.split(key)

    x = jax.random.normal(kx, (N, in_channels, H, W), dtype=jnp.float32)
    # Deterministic Conv2d-style init (uniform in +-1/sqrt(fan_in)), no bias.
    fan_in = in_channels * filter_size * filter_size
    bound = 1.0 / (fan_in ** 0.5)
    w = jax.random.uniform(
        kw, (out_channels, in_channels, filter_size, filter_size),
        minval=-bound, maxval=bound, dtype=jnp.float32)

    # One-time weight prep ("module init"), reused across forward calls.
    wmat = jax.block_until_ready(toeplitz_weight(w, W))

    out = jax.block_until_ready(cnn_relu_fwd(x, wmat))

    # Correctness check against XLA's conv (same semantics as torch Conv2d).
    ref = jax.lax.conv_general_dilated(
        x, w, window_strides=(1, 1), padding="SAME",
        dimension_numbers=("NCHW", "OIHW", "NCHW"))
    ref = jnp.maximum(ref, 0.0)
    assert out.shape == (N, out_channels, H, W)
    assert jnp.allclose(out, ref, atol=1e-5, rtol=1e-5), (
        float(jnp.max(jnp.abs(out - ref))))

    print("KERNEL_OK")
</pallas_src>

<mosaic_0001>
module attributes {stable_mosaic.version = 11 : i64} {
  func.func @conv_relu_kernel(%arg0: i32, %arg1: memref<36x64xf32, #tpu.memory_space<vmem>>, %arg2: memref<192x128xf32, #tpu.memory_space<vmem>>, %arg3: memref<2x16x128xf32, #tpu.memory_space<vmem>>) attributes {dimension_semantics = [#tpu.dimension_semantics<arbitrary>], iteration_bounds = array<i64: 1>, scalar_prefetch = 0 : i64, scratch_operands = 0 : i64, tpu.core_type = #tpu.core_type<tc>, window_params = [{pipeline_mode = #tpu.pipeline_mode<synchronous>, transform_indices = @transform_0, window_bounds = array<i64: 36, 64>}, {pipeline_mode = #tpu.pipeline_mode<synchronous>, transform_indices = @transform_1, window_bounds = array<i64: 192, 128>}, {pipeline_mode = #tpu.pipeline_mode<synchronous>, transform_indices = @transform_2, window_bounds = array<i64: 2, 16, 128>}]} {
    %c0 = arith.constant 0 : index
    %c0_0 = arith.constant 0 : index
    %0 = vector.load %arg1[%c0, %c0_0] : memref<36x64xf32, #tpu.memory_space<vmem>>, vector<36x64xf32>
    %1 = vector.extract_strided_slice %0 {offsets = [0, 0], sizes = [34, 64], strides = [1, 1]} : vector<36x64xf32> to vector<34x64xf32>
    %c0_1 = arith.constant 0 : index
    %c0_2 = arith.constant 0 : index
    %2 = vector.load %arg2[%c0_1, %c0_2] : memref<192x128xf32, #tpu.memory_space<vmem>>, vector<64x128xf32>
    %cst = arith.constant dense<0.000000e+00> : vector<34x128xf32>
    %3 = tpu.matmul %1, %2, %cst {dimension_numbers = #tpu.dot_dimension_numbers<[1], [0], [0], [1], [0, 0, 1, 1], [], []>} : vector<34x64xf32>, vector<64x128xf32>, vector<34x128xf32> -> vector<34x128xf32>
    %4 = vector.extract_strided_slice %0 {offsets = [1, 0], sizes = [34, 64], strides = [1, 1]} : vector<36x64xf32> to vector<34x64xf32>
    %c64 = arith.constant 64 : index
    %c0_3 = arith.constant 0 : index
    %5 = vector.load %arg2[%c64, %c0_3] : memref<192x128xf32, #tpu.memory_space<vmem>>, vector<64x128xf32>
    %cst_4 = arith.constant dense<0.000000e+00> : vector<34x128xf32>
    %6 = tpu.matmul %4, %5, %cst_4 {dimension_numbers = #tpu.dot_dimension_numbers<[1], [0], [0], [1], [0, 0, 1, 1], [], []>} : vector<34x64xf32>, vector<64x128xf32>, vector<34x128xf32> -> vector<34x128xf32>
    %7 = arith.addf %3, %6 : vector<34x128xf32>
    %8 = vector.extract_strided_slice %0 {offsets = [2, 0], sizes = [34, 64], strides = [1, 1]} : vector<36x64xf32> to vector<34x64xf32>
    %c128 = arith.constant 128 : index
    %c0_5 = arith.constant 0 : index
    %9 = vector.load %arg2[%c128, %c0_5] : memref<192x128xf32, #tpu.memory_space<vmem>>, vector<64x128xf32>
    %cst_6 = arith.constant dense<0.000000e+00> : vector<34x128xf32>
    %10 = tpu.matmul %8, %9, %cst_6 {dimension_numbers = #tpu.dot_dimension_numbers<[1], [0], [0], [1], [0, 0, 1, 1], [], []>} : vector<34x64xf32>, vector<64x128xf32>, vector<34x128xf32> -> vector<34x128xf32>
    %11 = arith.addf %7, %10 : vector<34x128xf32>
    %cst_7 = arith.constant 0.000000e+00 : f32
    %12 = vector.broadcast %cst_7 : f32 to vector<34x128xf32>
    %13 = arith.maximumf %11, %12 : vector<34x128xf32>
    %14 = vector.extract_strided_slice %13 {offsets = [0, 0], sizes = [16, 128], strides = [1, 1]} : vector<34x128xf32> to vector<16x128xf32>
    %c0_8 = arith.constant 0 : index
    %c0_9 = arith.constant 0 : index
    %c0_10 = arith.constant 0 : index
    %15 = vector.load %arg3[%c0_8, %c0_9, %c0_10] : memref<2x16x128xf32, #tpu.memory_space<vmem>>, vector<1x16x128xf32>
    %16 = vector.shape_cast %15 : vector<1x16x128xf32> to vector<16x128xf32>
    %17 = vector.shape_cast %14 : vector<16x128xf32> to vector<1x16x128xf32>
    tpu.vector_store %arg3[%c0_8, %c0_9, %c0_10], %17 {strides = array<i32>} : memref<2x16x128xf32, #tpu.memory_space<vmem>>, vector<1x16x128xf32>,
    %18 = vector.extract_strided_slice %13 {offsets = [18, 0], sizes = [16, 128], strides = [1, 1]} : vector<34x128xf32> to vector<16x128xf32>
    %c1 = arith.constant 1 : index
    %c0_11 = arith.constant 0 : index
    %c0_12 = arith.constant 0 : index
    %19 = vector.load %arg3[%c1, %c0_11, %c0_12] : memref<2x16x128xf32, #tpu.memory_space<vmem>>, vector<1x16x128xf32>
    %20 = vector.shape_cast %19 : vector<1x16x128xf32> to vector<16x128xf32>
    %21 = vector.shape_cast %18 : vector<16x128xf32> to vector<1x16x128xf32>
    tpu.vector_store %arg3[%c1, %c0_11, %c0_12], %21 {strides = array<i32>} : memref<2x16x128xf32, #tpu.memory_space<vmem>>, vector<1x16x128xf32>,
    return
  }
  func.func @transform_0(%arg0: i32) -> (i32, i32) {
    %c0_i32 = arith.constant 0 : i32
    %c0_i32_0 = arith.constant 0 : i32
    %c0_i32_1 = arith.constant 0 : i32
    return %c0_i32, %c0_i32_0 : i32, i32
  }
  func.func @transform_1(%arg0: i32) -> (i32, i32) {
    %c0_i32 = arith.constant 0 : i32
    %c0_i32_0 = arith.constant 0 : i32
    %c0_i32_1 = arith.constant 0 : i32
    return %c0_i32, %c0_i32_0 : i32, i32
  }
  func.func @transform_2(%arg0: i32) -> (i32, i32, i32) {
    %c0_i32 = arith.constant 0 : i32
    %c0_i32_0 = arith.constant 0 : i32
    %c0_i32_1 = arith.constant 0 : i32
    %c0_i32_2 = arith.constant 0 : i32
    return %c0_i32, %c0_i32_0, %c0_i32_1 : i32, i32, i32
  }
}

</mosaic_0001>

<llo_original>
// kernel: cnn_relu_fwd.1
$region0: #{cnn_relu_fwd.1}
  #allocation0 [shape = 'u32[]', space=smem, size = 0x4, offset = 0x4, fixed_abs, tag = 'smem constant byte address 0x4 - core index']
  #allocation1 [shape = 'u32[144,128]{1,0:T(1,128)}', space=vmem, size = 0x12000, scoped, tag = 'internal scratch']
  %s0 = inlined_call_operand.vmem [shape: f32[36,64], index: 0, kind: input, shape index: {}]
  %s1 = inlined_call_operand.vmem [shape: f32[192,128], index: 1, kind: input, shape index: {}]
  %s2 = inlined_call_operand.vmem [shape: f32[2,16,128], index: 2, kind: output, shape index: {}]
  %s3 = sld [smem:[#allocation0]]
  $region18: #{cnn_relu_fwd.1} parent=0
    _
  %s5 = ssub.s32 1, %s3
  %s6 = scalar_select 0, %s5, %s3
  // Predicated region
  $region2: #{cnn_relu_fwd.1} parent=0 // pred_check
    _
  $region3: #{cnn_relu_fwd.1} parent=0 // pred_check_branch
    %8 = sbr.rel (0) target = $region5
  $region4: #{cnn_relu_fwd.1} parent=0 // pred_region
    _
  $region5: #{cnn_relu_fwd.1} parent=0 // pred_fallthru
    _
  // Predicated region
  $region6: #{cnn_relu_fwd.1} parent=0 // pred_check
    _
  $region7: #{cnn_relu_fwd.1} parent=0 // pred_check_branch
    %10 = sbr.rel (0) target = $region9
  $region8: #{cnn_relu_fwd.1} parent=0 // pred_region
    _
  $region9: #{cnn_relu_fwd.1} parent=0 // pred_fallthru
    _
  %v11 = vld [vmem:[%s0] sm:$0xff]
  %v12 = vld [vmem:[%s0 + $0x8] sm:$0xff]
  %v13 = vld [vmem:[%s0 + $0x10] sm:$0xff]
  %v14 = vld [vmem:[%s0 + $0x18] sm:$0xff]
  %v15 = vld [vmem:[%s0 + $0x20] sm:$0xf]
  %v16 = vld [vmem:[%s1] sm:$0xff]
  %v17 = vld [vmem:[%s1 + $0x8] sm:$0xff]
  %v18 = vld [vmem:[%s1 + $0x10] sm:$0xff]
  %v19 = vld [vmem:[%s1 + $0x18] sm:$0xff]
  %v20 = vld [vmem:[%s1 + $0x20] sm:$0xff]
  %v21 = vld [vmem:[%s1 + $0x28] sm:$0xff]
  %v22 = vld [vmem:[%s1 + $0x30] sm:$0xff]
  %v23 = vld [vmem:[%s1 + $0x38] sm:$0xff]
  %v24 = vld [vmem:[%s1 + $0x40] sm:$0xff]
  %v25 = vld [vmem:[%s1 + $0x48] sm:$0xff]
  %v26 = vld [vmem:[%s1 + $0x50] sm:$0xff]
  %v27 = vld [vmem:[%s1 + $0x58] sm:$0xff]
  %v28 = vld [vmem:[%s1 + $0x60] sm:$0xff]
  %v29 = vld [vmem:[%s1 + $0x68] sm:$0xff]
  %v30 = vld [vmem:[%s1 + $0x70] sm:$0xff]
  %v31 = vld [vmem:[%s1 + $0x78] sm:$0xff]
  %vm37 = vcmask 1046528
  %v38 = vrot.slane %v11, 1
  %v39 = vrot.slane %v12, 1
  %v40 = vsel %vm37, %v38, %v39
  %v41 = vrot.slane %v13, 1
  %v42 = vsel %vm37, %v39, %v41
  %v43 = vrot.slane %v14, 1
  %v44 = vsel %vm37, %v41, %v43
  %v45 = vrot.slane %v15, 1
  %v46 = vsel %vm37, %v43, %v45
  %vm47 = vcmask 523264
  %v48 = vsel %vm47, %v40, 0
  %v50 = vsel %vm47, %v42, 0
  %v52 = vsel %vm47, %v44, 0
  %v54 = vsel %vm47, %v46, 0
  %v56 = vsel %vm47, %v45, 0
  %58 = vmatprep.subr.mxu0 0.0
  %59 = vmatpush1.msra.mxu0 %v24
  %60 = vmatprep.subr.mxu0 0.0
  %61 = vmatpush1.msra.mxu0 %v25
  %62 = vmatprep.subr.mxu0 0.0
  %63 = vmatpush1.msra.mxu0 %v26
  %64 = vmatprep.subr.mxu0 0.0
  %65 = vmatpush1.msra.mxu0 %v27
  %66 = vmatprep.subr.mxu0 0.0
  %67 = vmatpush1.msra.mxu0 %v28
  %68 = vmatprep.subr.mxu0 0.0
  %69 = vmatpush1.msra.mxu0 %v29
  %70 = vmatprep.subr.mxu0 0.0
  %71 = vmatpush1.msra.mxu0 %v30
  %72 = vmatprep.subr.mxu0 0.0
  %73 = vmatpush1.msra.mxu0 %v31
  %74 = vmatprep.subr.mxu0 0.0
  %75 = vmatpush1.msra.mxu0 0.0
  %76 = vmatprep.subr.mxu0 0.0
  %77 = vmatpush1.msra.mxu0 0.0
  %78 = vmatprep.subr.mxu0 0.0
  %79 = vmatpush1.msra.mxu0 0.0
  %80 = vmatprep.subr.mxu0 0.0
  %81 = vmatpush1.msra.mxu0 0.0
  %82 = vmatprep.subr.mxu0 0.0
  %83 = vmatpush1.msra.mxu0 0.0
  %84 = vmatprep.subr.mxu0 0.0
  %85 = vmatpush1.msra.mxu0 0.0
  %86 = vmatprep.subr.mxu0 0.0
  %87 = vmatpush1.msra.mxu0 0.0
  %88 = vmatprep.subr.mxu0 0.0
  %89 = vmatpush1.msra.mxu0 0.0
  %90 = vmatprep.subr.mxu0 0.0
  %91 = vmatpush1.msra.mxu0 0.0
  %92 = vmatprep.subr.mxu0 0.0
  %93 = vmatpush1.msra.mxu0 0.0
  %94 = vmatprep.subr.mxu0 0.0
  %95 = vmatpush1.msra.mxu0 0.0
  %96 = vmatprep.subr.mxu0 0.0
  %97 = vmatpush1.msra.mxu0 0.0
  %98 = vmatprep.subr.mxu0 0.0
  %99 = vmatpush1.msra.mxu0 0.0
  %100 = vmatprep.subr.mxu0 0.0
  %101 = vmatpush1.msra.mxu0 0.0
  %102 = vmatprep.subr.mxu0 0.0
  %103 = vmatpush1.msra.mxu0 0.0
  %104 = vmatprep.subr.mxu0 0.0
  %105 = vmatpush1.msra.mxu0 0.0
  %106 = vmatprep.subr.mxu0 0.0
  %107 = vmatpush1.msra.mxu0 0.0
  %108 = vmatprep.subr.mxu0 0.0
  %109 = vmatpush1.msra.mxu0 0.0
  %110 = vmatprep.subr.mxu0 0.0
  %111 = vmatpush1.msra.mxu0 0.0
  %112 = vmatprep.subr.mxu0 0.0
  %113 = vmatpush1.msra.mxu0 0.0
  %114 = vmatprep.subr.mxu0 0.0
  %115 = vmatpush1.msra.mxu0 0.0
  %116 = vmatprep.subr.mxu0 0.0
  %117 = vmatpush1.msra.mxu0 0.0
  %118 = vmatprep.subr.mxu0 0.0
  %119 = vmatpush1.msra.mxu0 0.0
  %120 = vmatprep.subr.mxu0 0.0
  %121 = vmatpush1.msra.mxu0 0.0
  %122 = vmatprep.mubr.f32.mxu0 0.0
  %123 = vmatmul.mubr.f32.gmra.mrb[0].mxu0 %v48
  %v124 = vpop.f32.mrb[0].mxu0
  %v125 = vadd.f32 0.0, %v124
  %v126 = vpop.f32.mrb[0].mxu0
  %127 = vmatprep.mubr.f32.mxu0 0.0
  %128 = vmatmul.mubr.f32.gmra.mrb[0].mxu0 %v50
  %v129 = vpop.f32.mrb[0].mxu0
  %v130 = vadd.f32 0.0, %v129
  %v131 = vpop.f32.mrb[0].mxu0
  %132 = vmatprep.mubr.f32.mxu0 0.0
  %133 = vmatmul.mubr.f32.gmra.mrb[0].mxu0 %v52
  %v134 = vpop.f32.mrb[0].mxu0
  %v135 = vadd.f32 0.0, %v134
  %v136 = vpop.f32.mrb[0].mxu0
  %137 = vmatprep.mubr.f32.mxu0 0.0
  %138 = vmatmul.mubr.f32.gmra.mrb[0].mxu0 %v54
  %v139 = vpop.f32.mrb[0].mxu0
  %v140 = vadd.f32 0.0, %v139
  %v141 = vpop.f32.mrb[0].mxu0
  %142 = vmatprep.mubr.f32.mxu0 0.0
  %143 = vmatmul.mubr.f32.gmra.mrb[0].mxu0 %v56
  %v144 = vpop.f32.mrb[0].mxu0
  %v145 = vadd.f32 0.0, %v144
  %v146 = vpop.f32.mrb[0].mxu0
  %147 = vdwg.mxu0
  %v148 = vsel %vm47, %v11, 0
  %v150 = vsel %vm47, %v12, 0
  %v152 = vsel %vm47, %v13, 0
  %v154 = vsel %vm47, %v14, 0
  %v156 = vsel %vm47, %v15, 0
  %158 = vmatprep.subr.mxu0 0.0
  %159 = vmatpush1.msra.mxu0 %v16
  %160 = vmatprep.subr.mxu0 0.0
  %161 = vmatpush1.msra.mxu0 %v17
  %162 = vmatprep.subr.mxu0 0.0
  %163 = vmatpush1.msra.mxu0 %v18
  %164 = vmatprep.subr.mxu0 0.0
  %165 = vmatpush1.msra.mxu0 %v19
  %166 = vmatprep.subr.mxu0 0.0
  %167 = vmatpush1.msra.mxu0 %v20
  %168 = vmatprep.subr.mxu0 0.0
  %169 = vmatpush1.msra.mxu0 %v21
  %170 = vmatprep.subr.mxu0 0.0
  %171 = vmatpush1.msra.mxu0 %v22
  %172 = vmatprep.subr.mxu0 0.0
  %173 = vmatpush1.msra.mxu0 %v23
  %174 = vmatprep.subr.mxu0 0.0
  %175 = vmatpush1.msra.mxu0 0.0
  %176 = vmatprep.subr.mxu0 0.0
  %177 = vmatpush1.msra.mxu0 0.0
  %178 = vmatprep.subr.mxu0 0.0
  %179 = vmatpush1.msra.mxu0 0.0
  %180 = vmatprep.subr.mxu0 0.0
  %181 = vmatpush1.msra.mxu0 0.0
  %182 = vmatprep.subr.mxu0 0.0
  %183 = vmatpush1.msra.mxu0 0.0
  %184 = vmatprep.subr.mxu0 0.0
  %185 = vmatpush1.msra.mxu0 0.0
  %186 = vmatprep.subr.mxu0 0.0
  %187 = vmatpush1.msra.mxu0 0.0
  %188 = vmatprep.subr.mxu0 0.0
  %189 = vmatpush1.msra.mxu0 0.0
  %190 = vmatprep.subr.mxu0 0.0
  %191 = vmatpush1.msra.mxu0 0.0
  %192 = vmatprep.subr.mxu0 0.0
  %193 = vmatpush1.msra.mxu0 0.0
  %194 = vmatprep.subr.mxu0 0.0
  %195 = vmatpush1.msra.mxu0 0.0
  %196 = vmatprep.subr.mxu0 0.0
  %197 = vmatpush1.msra.mxu0 0.0
  %198 = vmatprep.subr.mxu0 0.0
  %199 = vmatpush1.msra.mxu0 0.0
  %200 = vmatprep.subr.mxu0 0.0
  %201 = vmatpush1.msra.mxu0 0.0
  %202 = vmatprep.subr.mxu0 0.0
  %203 = vmatpush1.msra.mxu0 0.0
  %204 = vmatprep.subr.mxu0 0.0
  %205 = vmatpush1.msra.mxu0 0.0
  %206 = vmatprep.subr.mxu0 0.0
  %207 = vmatpush1.msra.mxu0 0.0
  %208 = vmatprep.subr.mxu0 0.0
  %209 = vmatpush1.msra.mxu0 0.0
  %210 = vmatprep.subr.mxu0 0.0
  %211 = vmatpush1.msra.mxu0 0.0
  %212 = vmatprep.subr.mxu0 0.0
  %213 = vmatpush1.msra.mxu0 0.0
  %214 = vmatprep.subr.mxu0 0.0
  %215 = vmatpush1.msra.mxu0 0.0
  %216 = vmatprep.subr.mxu0 0.0
  %217 = vmatpush1.msra.mxu0 0.0
  %218 = vmatprep.subr.mxu0 0.0
  %219 = vmatpush1.msra.mxu0 0.0
  %220 = vmatprep.subr.mxu0 0.0
  %221 = vmatpush1.msra.mxu0 0.0
  %222 = vmatprep.mubr.f32.mxu0 0.0
  %223 = vmatmul.mubr.f32.gmra.mrb[0].mxu0 %v148
  %v224 = vpop.f32.mrb[0].mxu0
  %v225 = vadd.f32 %v125, %v224
  %v226 = vpop.f32.mrb[0].mxu0
  %227 = vmatprep.mubr.f32.mxu0 0.0
  %228 = vmatmul.mubr.f32.gmra.mrb[0].mxu0 %v150
  %v229 = vpop.f32.mrb[0].mxu0
  %v230 = vadd.f32 %v130, %v229
  %v231 = vpop.f32.mrb[0].mxu0
  %232 = vmatprep.mubr.f32.mxu0 0.0
  %233 = vmatmul.mubr.f32.gmra.mrb[0].mxu0 %v152
  %v234 = vpop.f32.mrb[0].mxu0
  %v235 = vadd.f32 %v135, %v234
  %v236 = vpop.f32.mrb[0].mxu0
  %237 = vmatprep.mubr.f32.mxu0 0.0
  %238 = vmatmul.mubr.f32.gmra.mrb[0].mxu0 %v154
  %v239 = vpop.f32.mrb[0].mxu0
  %v240 = vadd.f32 %v140, %v239
  %v241 = vpop.f32.mrb[0].mxu0
  %242 = vmatprep.mubr.f32.mxu0 0.0
  %243 = vmatmul.mubr.f32.gmra.mrb[0].mxu0 %v156
  %v244 = vpop.f32.mrb[0].mxu0
  %v245 = vadd.f32 %v145, %v244
  %v246 = vpop.f32.mrb[0].mxu0
  %247 = vdwg.mxu0
  %v248 = vld [vmem:[%s1 + $0x80] sm:$0xff]
  %v249 = vld [vmem:[%s1 + $0x88] sm:$0xff]
  %v250 = vld [vmem:[%s1 + $0x90] sm:$0xff]
  %v251 = vld [vmem:[%s1 + $0x98] sm:$0xff]
  %v252 = vld [vmem:[%s1 + $0xa0] sm:$0xff]
  %v253 = vld [vmem:[%s1 + $0xa8] sm:$0xff]
  %v254 = vld [vmem:[%s1 + $0xb0] sm:$0xff]
  %v255 = vld [vmem:[%s1 + $0xb8] sm:$0xff]
  %vm256 = vcmask 1045504
  %v257 = vrot.slane %v11, 2
  %v258 = vrot.slane %v12, 2
  %v259 = vsel %vm256, %v257, %v258
  %v260 = vrot.slane %v13, 2
  %v261 = vsel %vm256, %v258, %v260
  %v262 = vrot.slane %v14, 2
  %v263 = vsel %vm256, %v260, %v262
  %v264 = vrot.slane %v15, 2
  %v265 = vsel %vm256, %v262, %v264
  %v266 = vsel %vm47, %v259, 0
  %v268 = vsel %vm47, %v261, 0
  %v270 = vsel %vm47, %v263, 0
  %v272 = vsel %vm47, %v265, 0
  %v274 = vsel %vm47, %v264, 0
  %276 = vmatprep.subr.mxu0 0.0
  %277 = vmatpush1.msra.mxu0 %v248
  %278 = vmatprep.subr.mxu0 0.0
  %279 = vmatpush1.msra.mxu0 %v249
  %280 = vmatprep.subr.mxu0 0.0
  %281 = vmatpush1.msra.mxu0 %v250
  %282 = vmatprep.subr.mxu0 0.0
  %283 = vmatpush1.msra.mxu0 %v251
  %284 = vmatprep.subr.mxu0 0.0
  %285 = vmatpush1.msra.mxu0 %v252
  %286 = vmatprep.subr.mxu0 0.0
  %287 = vmatpush1.msra.mxu0 %v253
  %288 = vmatprep.subr.mxu0 0.0
  %289 = vmatpush1.msra.mxu0 %v254
  %290 = vmatprep.subr.mxu0 0.0
  %291 = vmatpush1.msra.mxu0 %v255
  %292 = vmatprep.subr.mxu0 0.0
  %293 = vmatpush1.msra.mxu0 0.0
  %294 = vmatprep.subr.mxu0 0.0
  %295 = vmatpush1.msra.mxu0 0.0
  %296 = vmatprep.subr.mxu0 0.0
  %297 = vmatpush1.msra.mxu0 0.0
  %298 = vmatprep.subr.mxu0 0.0
  %299 = vmatpush1.msra.mxu0 0.0
  %300 = vmatprep.subr.mxu0 0.0
  %301 = vmatpush1.msra.mxu0 0.0
  %302 = vmatprep.subr.mxu0 0.0
  %303 = vmatpush1.msra.mxu0 0.0
  %304 = vmatprep.subr.mxu0 0.0
  %305 = vmatpush1.msra.mxu0 0.0
  %306 = vmatprep.subr.mxu0 0.0
  %307 = vmatpush1.msra.mxu0 0.0
  %308 = vmatprep.subr.mxu0 0.0
  %309 = vmatpush1.msra.mxu0 0.0
  %310 = vmatprep.subr.mxu0 0.0
  %311 = vmatpush1.msra.mxu0 0.0
  %312 = vmatprep.subr.mxu0 0.0
  %313 = vmatpush1.msra.mxu0 0.0
  %314 = vmatprep.subr.mxu0 0.0
  %315 = vmatpush1.msra.mxu0 0.0
  %316 = vmatprep.subr.mxu0 0.0
  %317 = vmatpush1.msra.mxu0 0.0
  %318 = vmatprep.subr.mxu0 0.0
  %319 = vmatpush1.msra.mxu0 0.0
  %320 = vmatprep.subr.mxu0 0.0
  %321 = vmatpush1.msra.mxu0 0.0
  %322 = vmatprep.subr.mxu0 0.0
  %323 = vmatpush1.msra.mxu0 0.0
  %324 = vmatprep.subr.mxu0 0.0
  %325 = vmatpush1.msra.mxu0 0.0
  %326 = vmatprep.subr.mxu0 0.0
  %327 = vmatpush1.msra.mxu0 0.0
  %328 = vmatprep.subr.mxu0 0.0
  %329 = vmatpush1.msra.mxu0 0.0
  %330 = vmatprep.subr.mxu0 0.0
  %331 = vmatpush1.msra.mxu0 0.0
  %332 = vmatprep.subr.mxu0 0.0
  %333 = vmatpush1.msra.mxu0 0.0
  %334 = vmatprep.subr.mxu0 0.0
  %335 = vmatpush1.msra.mxu0 0.0
  %336 = vmatprep.subr.mxu0 0.0
  %337 = vmatpush1.msra.mxu0 0.0
  %338 = vmatprep.subr.mxu0 0.0
  %339 = vmatpush1.msra.mxu0 0.0
  %340 = vmatprep.mubr.f32.mxu0 0.0
  %341 = vmatmul.mubr.f32.gmra.mrb[0].mxu0 %v266
  %v342 = vpop.f32.mrb[0].mxu0
  %v343 = vadd.f32 0.0, %v342
  %v344 = vpop.f32.mrb[0].mxu0
  %345 = vmatprep.mubr.f32.mxu0 0.0
  %346 = vmatmul.mubr.f32.gmra.mrb[0].mxu0 %v268
  %v347 = vpop.f32.mrb[0].mxu0
  %v348 = vadd.f32 0.0, %v347
  %v349 = vpop.f32.mrb[0].mxu0
  %350 = vmatprep.mubr.f32.mxu0 0.0
  %351 = vmatmul.mubr.f32.gmra.mrb[0].mxu0 %v270
  %v352 = vpop.f32.mrb[0].mxu0
  %v353 = vadd.f32 0.0, %v352
  %v354 = vpop.f32.mrb[0].mxu0
  %355 = vmatprep.mubr.f32.mxu0 0.0
  %356 = vmatmul.mubr.f32.gmra.mrb[0].mxu0 %v272
  %v357 = vpop.f32.mrb[0].mxu0
  %v358 = vadd.f32 0.0, %v357
  %v359 = vpop.f32.mrb[0].mxu0
  %360 = vmatprep.mubr.f32.mxu0 0.0
  %361 = vmatmul.mubr.f32.gmra.mrb[0].mxu0 %v274
  %v362 = vpop.f32.mrb[0].mxu0
  %v363 = vadd.f32 0.0, %v362
  %v364 = vpop.f32.mrb[0].mxu0
  %365 = vdwg.mxu0
  %v366 = vadd.f32 %v225, %v343
  %v367 = vadd.f32 %v230, %v348
  %v368 = vadd.f32 %v235, %v353
  %v369 = vadd.f32 %v240, %v358
  %v370 = vadd.f32 %v245, %v363
  %v371 = vmax.f32 %v366, 0.0
  %v372 = vmax.f32 %v367, 0.0
  %v373 = vmax.f32 %v368, 0.0
  %v374 = vmax.f32 %v369, 0.0
  %v375 = vmax.f32 %v370, 0.0
  %376 = vst [vmem:[%s2] sm:$0xff] %v371
  %377 = vst [vmem:[%s2 + $0x8] sm:$0xff] %v372
  %s378 = scalar_lea.vmem %s2, 16
  %379 = vst [vmem:[%s378 - $0x2] sm:$0xfc] %v373
  %380 = vst [vmem:[%s378 + $0x6] sm:$0xff] %v374
  %381 = vst [vmem:[%s378 + $0xe] sm:$0x3] %v375
  // Predicated region
  $region10: #{cnn_relu_fwd.1} parent=0 // pred_check
    _
  $region11: #{cnn_relu_fwd.1} parent=0 // pred_check_branch
    %383 = sbr.rel (0) target = $region13
  $region12: #{cnn_relu_fwd.1} parent=0 // pred_region
    _
  $region13: #{cnn_relu_fwd.1} parent=0 // pred_fallthru
    _
  // Predicated region
  $region14: #{cnn_relu_fwd.1} parent=0 // pred_check
    _
  $region15: #{cnn_relu_fwd.1} parent=0 // pred_check_branch
    %385 = sbr.rel (0) target = $region17
  $region16: #{cnn_relu_fwd.1} parent=0 // pred_region
    _
  $region17: #{cnn_relu_fwd.1} parent=0 // pred_fallthru
    _

</llo_original>
